<compile_context>
chip_gen: v5e
topology: v5e:2x2
jax: 0.10.0
libtpu: 0.0.40
codegen_flags: <defaults>
</compile_context>

<pallas_src>
import functools

import jax
import jax.numpy as jnp
from jax.experimental import pallas as pl
from jax.experimental.pallas import tpu as pltpu


def _vmem_capacity_bytes():
    try:
        return int(pltpu.get_tpu_info().vmem_capacity_bytes)
    except Exception:
        # Conservative fallback (v7x per-TensorCore capacity) -> safe everywhere.
        return 64 * 1024 * 1024


def _f1_sums_kernel(pred_ref, label_ref, tp_ref, sp_ref, sl_ref, *,
                    batch, tile_b, steps_per_split, needs_mask):
    s = pl.program_id(0)   # split ("parallel") axis
    i = pl.program_id(1)   # batch-tile reduction ("arbitrary") axis

    @pl.when(i == 0)
    def _init():
        tp_ref[...] = jnp.zeros_like(tp_ref)
        sp_ref[...] = jnp.zeros_like(sp_ref)
        sl_ref[...] = jnp.zeros_like(sl_ref)

    pred = pred_ref[...]      # [TILE_B, C] native dtype
    label = label_ref[...]    # [TILE_B, C] native dtype

    # Binarize along the class axis in the native dtype
    # (torch `==` semantics: ties with the row max produce multiple ones).
    p = (pred == jnp.max(pred, axis=-1, keepdims=True)).astype(jnp.float32)
    l = (label == jnp.max(label, axis=-1, keepdims=True)).astype(jnp.float32)

    def _accumulate(pv, lv):
        tp_ref[...] += jnp.sum(lv * pv, axis=0, keepdims=True)   # true positives
        sp_ref[...] += jnp.sum(pv, axis=0, keepdims=True)        # predicted positives
        sl_ref[...] += jnp.sum(lv, axis=0, keepdims=True)        # actual positives

    if needs_mask:
        tile_idx = s * steps_per_split + i
        tile_is_full = (tile_idx + 1) * tile_b <= batch

        @pl.when(tile_is_full)
        def _full():
            _accumulate(p, l)

        @pl.when(jnp.logical_not(tile_is_full))
        def _partial():
            # Ragged last tile (and fully out-of-range padded tiles, whose DMA was
            # clamped to the last real tile): mask invalid rows.
            row = tile_idx * tile_b + jax.lax.broadcasted_iota(
                jnp.int32, (tile_b, 1), 0)
            valid = (row < batch).astype(jnp.float32)
            _accumulate(p * valid, l * valid)
    else:
        _accumulate(p, l)


def _choose_tile_b(batch, n_classes, itemsize, per_buffer_bytes):
    """Batch tile sized from the lane-padded VMEM budget, sublane-packing aligned."""
    itemsize = int(itemsize)
    pack = max(1, 4 // max(1, itemsize))       # sublane packing factor
    sub_mult = 8 * pack                        # 8 f32 / 16 bf16 / 32 int8-fp8
    c_pad = pl.cdiv(n_classes, 128) * 128      # lane padding
    tile = per_buffer_bytes // max(1, c_pad * itemsize)
    tile = (tile // sub_mult) * sub_mult
    tile = max(sub_mult, tile)                 # floor (huge-C would need class tiling)
    if tile >= batch:
        # Whole batch fits in one block: full-array block, no masking needed.
        return int(batch)
    return int(tile)


def f1_score(prediction, label, classes=None, tile_b=None):
    """Pallas equivalent of F1.forward. Returns a scalar f32."""
    assert prediction.shape == label.shape and prediction.ndim == 2
    B, C = prediction.shape

    cap = _vmem_capacity_bytes()
    if tile_b is None:
        tile_b = _choose_tile_b(B, C, prediction.dtype.itemsize, cap // 12)

    num_tiles = pl.cdiv(B, tile_b)
    n_splits = 2 if num_tiles >= 2 else 1          # megacore split (v7x); free elsewhere
    steps = pl.cdiv(num_tiles, n_splits)
    needs_mask = (n_splits * steps * tile_b != B)  # ragged or padded tiles present
    last_tile = num_tiles - 1

    kernel = functools.partial(
        _f1_sums_kernel, batch=B, tile_b=tile_b,
        steps_per_split=steps, needs_mask=needs_mask)

    def in_map(s, i):
        # Clamp padded tiles (beyond the real tile count) onto the last real tile
        # so the DMA stays in bounds; the kernel fully masks their contribution.
        return (jnp.minimum(s * steps + i, last_tile), 0)

    out_struct = jax.ShapeDtypeStruct((n_splits, 1, C), jnp.float32)
    out_spec = pl.BlockSpec((None, 1, C), lambda s, i: (s, 0, 0))

    tp_p, sp_p, sl_p = pl.pallas_call(
        kernel,
        out_shape=(out_struct, out_struct, out_struct),
        grid_spec=pltpu.PrefetchScalarGridSpec(
            num_scalar_prefetch=0,
            grid=(n_splits, steps),
            in_specs=[
                pl.BlockSpec((tile_b, C), in_map),
                pl.BlockSpec((tile_b, C), in_map),
            ],
            out_specs=[out_spec, out_spec, out_spec],
        ),
        compiler_params=pltpu.CompilerParams(
            # Split axis is independent (megacore), batch-tile axis is a reduction
            # into the resident output accumulators.
            dimension_semantics=("parallel", "arbitrary"),
            vmem_limit_bytes=int(min(cap * 3 // 4, 100 * 1024 * 1024)),
        ),
    )(prediction, label)

    # O(C) finalize in plain JAX (per perf review): combine per-split partials,
    # derive fp/fn, compute per-class F1 and the (sub)class mean.
    tp = jnp.sum(tp_p, axis=(0, 1))
    sp = jnp.sum(sp_p, axis=(0, 1))
    sl = jnp.sum(sl_p, axis=(0, 1))
    fp = sp - tp                                   # (1 - l) * p summed
    fn = sl - tp                                   # l * (1 - p) summed
    precision = tp / (tp + fp + 1e-08)
    recall = tp / (tp + fn + 1e-08)
    f1 = 2.0 * (precision * recall) / (precision + recall + 1e-08)
    if classes is None:
        return jnp.mean(f1)
    return jnp.mean(f1[jnp.asarray(classes, dtype=jnp.int32)])


def _reference_f1(prediction, label, classes=None):
    """Pure-JAX reference mirroring the PyTorch module exactly."""
    p = (prediction == prediction.max(axis=-1, keepdims=True)).astype(jnp.float32)
    l = (label == label.max(axis=-1, keepdims=True)).astype(jnp.float32)
    cls = range(prediction.shape[-1]) if classes is None else classes
    f1s = []
    for c in cls:
        p_, l_ = p[..., c], l[..., c]
        tp = (l_ * p_).sum(axis=-1)
        fp = ((1.0 - l_) * p_).sum(axis=-1)
        fn = (l_ * (1.0 - p_)).sum(axis=-1)
        prec = tp / (tp + fp + 1e-08)
        rec = tp / (tp + fn + 1e-08)
        f1s.append(2.0 * (prec * rec) / (prec + rec + 1e-08))
    return jnp.mean(jnp.stack(f1s))


if __name__ == "__main__":
    key = jax.random.PRNGKey(0)
    k1, k2, k3, k4, k5, k6, k7, k8 = jax.random.split(key, 8)

    # Case 1: basic shape, all classes, single tile / single split.
    B, C = 8, 6
    pred = jax.random.normal(k1, (B, C), dtype=jnp.float32)
    lab = jax.random.normal(k2, (B, C), dtype=jnp.float32)
    res = f1_score(pred, lab, classes=None)
    jax.block_until_ready(res)
    ref = _reference_f1(pred, lab, classes=None)
    assert jnp.allclose(res, ref, atol=1e-5, rtol=1e-5), (res, ref)

    # Case 2: forced small tile -> multi-tile, 2-way split, ragged last tile AND
    # an out-of-range padded tile (clamped + masked), plus class subset.
    B2, C2 = 36, 6
    pred2 = jax.random.normal(k3, (B2, C2), dtype=jnp.float32)
    lab2 = jax.random.normal(k4, (B2, C2), dtype=jnp.float32)
    classes = (0, 2, 5)
    res2 = f1_score(pred2, lab2, classes=classes, tile_b=8)
    jax.block_until_ready(res2)
    ref2 = _reference_f1(pred2, lab2, classes=classes)
    assert jnp.allclose(res2, ref2, atol=1e-5, rtol=1e-5), (res2, ref2)

    # Case 3: batch not a multiple of 8 (single full-array block, no mask path).
    B3, C3 = 13, 6
    pred3 = jax.random.normal(k5, (B3, C3), dtype=jnp.float32)
    lab3 = jax.random.normal(k6, (B3, C3), dtype=jnp.float32)
    res3 = f1_score(pred3, lab3, classes=None)
    jax.block_until_ready(res3)
    ref3 = _reference_f1(pred3, lab3, classes=None)
    assert jnp.allclose(res3, ref3, atol=1e-5, rtol=1e-5), (res3, ref3)

    # Case 4: even tile count -> 2-way split with no masking at all.
    B4, C4 = 32, 6
    pred4 = jax.random.normal(k7, (B4, C4), dtype=jnp.float32)
    lab4 = jax.random.normal(k8, (B4, C4), dtype=jnp.float32)
    res4 = f1_score(pred4, lab4, classes=None, tile_b=16)
    jax.block_until_ready(res4)
    ref4 = _reference_f1(pred4, lab4, classes=None)
    assert jnp.allclose(res4, ref4, atol=1e-5, rtol=1e-5), (res4, ref4)

    print("KERNEL_OK")
</pallas_src>

<mosaic_0001>
module attributes {stable_mosaic.version = 11 : i64} {
  func.func @_f1_sums_kernel(%arg0: i32, %arg1: i32, %arg2: memref<8x6xf32, #tpu.memory_space<vmem>>, %arg3: memref<8x6xf32, #tpu.memory_space<vmem>>, %arg4: memref<1x1x6xf32, #tpu.memory_space<vmem>>, %arg5: memref<1x1x6xf32, #tpu.memory_space<vmem>>, %arg6: memref<1x1x6xf32, #tpu.memory_space<vmem>>) attributes {dimension_semantics = [#tpu.dimension_semantics<parallel>, #tpu.dimension_semantics<arbitrary>], iteration_bounds = array<i64: 1, 1>, scalar_prefetch = 0 : i64, scratch_operands = 0 : i64, tpu.core_type = #tpu.core_type<tc>, window_params = [{transform_indices = @transform_0, window_bounds = array<i64: 8, 6>}, {transform_indices = @transform_1, window_bounds = array<i64: 8, 6>}, {transform_indices = @transform_2, window_bounds = array<i64: 1, 1, 6>}, {transform_indices = @transform_3, window_bounds = array<i64: 1, 1, 6>}, {transform_indices = @transform_4, window_bounds = array<i64: 1, 1, 6>}]} {
    %c0_i32 = arith.constant 0 : i32
    %0 = arith.cmpi eq, %arg1, %c0_i32 : i32
    %1 = arith.extui %0 : i1 to i32
    %c0_i32_0 = arith.constant 0 : i32
    %2 = arith.cmpi ne, %1, %c0_i32_0 : i32
    scf.if %2 {
      %cst_26 = arith.constant 0.000000e+00 : f32
      %42 = vector.broadcast %cst_26 : f32 to vector<1x6xf32>
      %c0_27 = arith.constant 0 : index
      %c0_28 = arith.constant 0 : index
      %c0_29 = arith.constant 0 : index
      %43 = vector.load %arg4[%c0_27, %c0_28, %c0_29] : memref<1x1x6xf32, #tpu.memory_space<vmem>>, vector<1x1x6xf32>
      %44 = vector.shape_cast %43 : vector<1x1x6xf32> to vector<1x6xf32>
      %45 = vector.shape_cast %42 : vector<1x6xf32> to vector<1x1x6xf32>
      tpu.vector_store %arg4[%c0_27, %c0_28, %c0_29], %45 {strides = array<i32>} : memref<1x1x6xf32, #tpu.memory_space<vmem>>, vector<1x1x6xf32>,
      %cst_30 = arith.constant 0.000000e+00 : f32
      %46 = vector.broadcast %cst_30 : f32 to vector<1x6xf32>
      %c0_31 = arith.constant 0 : index
      %c0_32 = arith.constant 0 : index
      %c0_33 = arith.constant 0 : index
      %47 = vector.load %arg5[%c0_31, %c0_32, %c0_33] : memref<1x1x6xf32, #tpu.memory_space<vmem>>, vector<1x1x6xf32>
      %48 = vector.shape_cast %47 : vector<1x1x6xf32> to vector<1x6xf32>
      %49 = vector.shape_cast %46 : vector<1x6xf32> to vector<1x1x6xf32>
      tpu.vector_store %arg5[%c0_31, %c0_32, %c0_33], %49 {strides = array<i32>} : memref<1x1x6xf32, #tpu.memory_space<vmem>>, vector<1x1x6xf32>,
      %cst_34 = arith.constant 0.000000e+00 : f32
      %50 = vector.broadcast %cst_34 : f32 to vector<1x6xf32>
      %c0_35 = arith.constant 0 : index
      %c0_36 = arith.constant 0 : index
      %c0_37 = arith.constant 0 : index
      %51 = vector.load %arg6[%c0_35, %c0_36, %c0_37] : memref<1x1x6xf32, #tpu.memory_space<vmem>>, vector<1x1x6xf32>
      %52 = vector.shape_cast %51 : vector<1x1x6xf32> to vector<1x6xf32>
      %53 = vector.shape_cast %50 : vector<1x6xf32> to vector<1x1x6xf32>
      tpu.vector_store %arg6[%c0_35, %c0_36, %c0_37], %53 {strides = array<i32>} : memref<1x1x6xf32, #tpu.memory_space<vmem>>, vector<1x1x6xf32>,
    } else {
    }
    %c0 = arith.constant 0 : index
    %c0_1 = arith.constant 0 : index
    %3 = vector.load %arg2[%c0, %c0_1] : memref<8x6xf32, #tpu.memory_space<vmem>>, vector<8x6xf32>
    %c0_2 = arith.constant 0 : index
    %c0_3 = arith.constant 0 : index
    %4 = vector.load %arg3[%c0_2, %c0_3] : memref<8x6xf32, #tpu.memory_space<vmem>>, vector<8x6xf32>
    %cst = arith.constant dense<0xFF800000> : vector<8xf32>
    %5 = vector.multi_reduction <maximumf>, %3, %cst [1] : vector<8x6xf32> to vector<8xf32>
    %6 = vector.shape_cast %5 : vector<8xf32> to vector<8x1xf32>
    %7 = vector.broadcast %6 : vector<8x1xf32> to vector<8x6xf32>
    %8 = arith.cmpf oeq, %3, %7 : vector<8x6xf32>
    %9 = arith.extui %8 : vector<8x6xi1> to vector<8x6xi32>
    %10 = arith.sitofp %9 : vector<8x6xi32> to vector<8x6xf32>
    %cst_4 = arith.constant dense<0xFF800000> : vector<8xf32>
    %11 = vector.multi_reduction <maximumf>, %4, %cst_4 [1] : vector<8x6xf32> to vector<8xf32>
    %12 = vector.shape_cast %11 : vector<8xf32> to vector<8x1xf32>
    %13 = vector.broadcast %12 : vector<8x1xf32> to vector<8x6xf32>
    %14 = arith.cmpf oeq, %4, %13 : vector<8x6xf32>
    %15 = arith.extui %14 : vector<8x6xi1> to vector<8x6xi32>
    %16 = arith.sitofp %15 : vector<8x6xi32> to vector<8x6xf32>
    %c0_5 = arith.constant 0 : index
    %c0_6 = arith.constant 0 : index
    %c0_7 = arith.constant 0 : index
    %17 = vector.load %arg4[%c0_5, %c0_6, %c0_7] : memref<1x1x6xf32, #tpu.memory_space<vmem>>, vector<1x1x6xf32>
    %18 = vector.shape_cast %17 : vector<1x1x6xf32> to vector<1x6xf32>
    %19 = arith.mulf %16, %10 : vector<8x6xf32>
    %cst_8 = arith.constant dense<0.000000e+00> : vector<6xf32>
    %20 = vector.multi_reduction <add>, %19, %cst_8 [0] : vector<8x6xf32> to vector<6xf32>
    %21 = vector.shape_cast %20 : vector<6xf32> to vector<1x6xf32>
    %22 = arith.addf %18, %21 : vector<1x6xf32>
    %c0_9 = arith.constant 0 : index
    %c0_10 = arith.constant 0 : index
    %c0_11 = arith.constant 0 : index
    %23 = vector.load %arg4[%c0_9, %c0_10, %c0_11] : memref<1x1x6xf32, #tpu.memory_space<vmem>>, vector<1x1x6xf32>
    %24 = vector.shape_cast %23 : vector<1x1x6xf32> to vector<1x6xf32>
    %25 = vector.shape_cast %22 : vector<1x6xf32> to vector<1x1x6xf32>
    tpu.vector_store %arg4[%c0_9, %c0_10, %c0_11], %25 {strides = array<i32>} : memref<1x1x6xf32, #tpu.memory_space<vmem>>, vector<1x1x6xf32>,
    %c0_12 = arith.constant 0 : index
    %c0_13 = arith.constant 0 : index
    %c0_14 = arith.constant 0 : index
    %26 = vector.load %arg5[%c0_12, %c0_13, %c0_14] : memref<1x1x6xf32, #tpu.memory_space<vmem>>, vector<1x1x6xf32>
    %27 = vector.shape_cast %26 : vector<1x1x6xf32> to vector<1x6xf32>
    %cst_15 = arith.constant dense<0.000000e+00> : vector<6xf32>
    %28 = vector.multi_reduction <add>, %10, %cst_15 [0] : vector<8x6xf32> to vector<6xf32>
    %29 = vector.shape_cast %28 : vector<6xf32> to vector<1x6xf32>
    %30 = arith.addf %27, %29 : vector<1x6xf32>
    %c0_16 = arith.constant 0 : index
    %c0_17 = arith.constant 0 : index
    %c0_18 = arith.constant 0 : index
    %31 = vector.load %arg5[%c0_16, %c0_17, %c0_18] : memref<1x1x6xf32, #tpu.memory_space<vmem>>, vector<1x1x6xf32>
    %32 = vector.shape_cast %31 : vector<1x1x6xf32> to vector<1x6xf32>
    %33 = vector.shape_cast %30 : vector<1x6xf32> to vector<1x1x6xf32>
    tpu.vector_store %arg5[%c0_16, %c0_17, %c0_18], %33 {strides = array<i32>} : memref<1x1x6xf32, #tpu.memory_space<vmem>>, vector<1x1x6xf32>,
    %c0_19 = arith.constant 0 : index
    %c0_20 = arith.constant 0 : index
    %c0_21 = arith.constant 0 : index
    %34 = vector.load %arg6[%c0_19, %c0_20, %c0_21] : memref<1x1x6xf32, #tpu.memory_space<vmem>>, vector<1x1x6xf32>
    %35 = vector.shape_cast %34 : vector<1x1x6xf32> to vector<1x6xf32>
    %cst_22 = arith.constant dense<0.000000e+00> : vector<6xf32>
    %36 = vector.multi_reduction <add>, %16, %cst_22 [0] : vector<8x6xf32> to vector<6xf32>
    %37 = vector.shape_cast %36 : vector<6xf32> to vector<1x6xf32>
    %38 = arith.addf %35, %37 : vector<1x6xf32>
    %c0_23 = arith.constant 0 : index
    %c0_24 = arith.constant 0 : index
    %c0_25 = arith.constant 0 : index
    %39 = vector.load %arg6[%c0_23, %c0_24, %c0_25] : memref<1x1x6xf32, #tpu.memory_space<vmem>>, vector<1x1x6xf32>
    %40 = vector.shape_cast %39 : vector<1x1x6xf32> to vector<1x6xf32>
    %41 = vector.shape_cast %38 : vector<1x6xf32> to vector<1x1x6xf32>
    tpu.vector_store %arg6[%c0_23, %c0_24, %c0_25], %41 {strides = array<i32>} : memref<1x1x6xf32, #tpu.memory_space<vmem>>, vector<1x1x6xf32>,
    return
  }
  func.func @transform_0(%arg0: i32, %arg1: i32) -> (i32, i32) {
    %c1_i32 = arith.constant 1 : i32
    %0 = arith.muli %arg0, %c1_i32 : i32
    %1 = arith.addi %0, %arg1 : i32
    %c0_i32 = arith.constant 0 : i32
    %2 = arith.minsi %1, %c0_i32 : i32
    %c0_i32_0 = arith.constant 0 : i32
    %c0_i32_1 = arith.constant 0 : i32
    return %2, %c0_i32_0 : i32, i32
  }
  func.func @transform_1(%arg0: i32, %arg1: i32) -> (i32, i32) {
    %c1_i32 = arith.constant 1 : i32
    %0 = arith.muli %arg0, %c1_i32 : i32
    %1 = arith.addi %0, %arg1 : i32
    %c0_i32 = arith.constant 0 : i32
    %2 = arith.minsi %1, %c0_i32 : i32
    %c0_i32_0 = arith.constant 0 : i32
    %c0_i32_1 = arith.constant 0 : i32
    return %2, %c0_i32_0 : i32, i32
  }
  func.func @transform_2(%arg0: i32, %arg1: i32) -> (i32, i32, i32) {
    %c0_i32 = arith.constant 0 : i32
    %c0_i32_0 = arith.constant 0 : i32
    %c0_i32_1 = arith.constant 0 : i32
    return %arg0, %c0_i32, %c0_i32_0 : i32, i32, i32
  }
  func.func @transform_3(%arg0: i32, %arg1: i32) -> (i32, i32, i32) {
    %c0_i32 = arith.constant 0 : i32
    %c0_i32_0 = arith.constant 0 : i32
    %c0_i32_1 = arith.constant 0 : i32
    return %arg0, %c0_i32, %c0_i32_0 : i32, i32, i32
  }
  func.func @transform_4(%arg0: i32, %arg1: i32) -> (i32, i32, i32) {
    %c0_i32 = arith.constant 0 : i32
    %c0_i32_0 = arith.constant 0 : i32
    %c0_i32_1 = arith.constant 0 : i32
    return %arg0, %c0_i32, %c0_i32_0 : i32, i32, i32
  }
}

</mosaic_0001>

<llo_original>
// kernel: tpu_custom_call.1
$region0: #{tpu_custom_call.1}
  #allocation0 [shape = 'u32[]', space=smem, size = 0x4, offset = 0x4, fixed_abs, tag = 'smem constant byte address 0x4 - core index']
  #allocation1 [shape = 'u32[72,128]{1,0:T(1,128)}', space=vmem, size = 0x9000, scoped, tag = 'internal scratch']
  %s0 = inlined_call_operand.hbm [shape: f32[8,6], index: 0, kind: input, shape index: {}]
  %s1 = inlined_call_operand.hbm [shape: f32[8,6], index: 1, kind: input, shape index: {}]
  %s2 = inlined_call_operand.hbm [shape: f32[1,1,6], index: 2, kind: output, shape index: {0}]
  %s3 = inlined_call_operand.hbm [shape: f32[1,1,6], index: 3, kind: output, shape index: {1}]
  %s4 = inlined_call_operand.hbm [shape: f32[1,1,6], index: 4, kind: output, shape index: {2}]
  %5 = xla_tuple %s2, %s3, %s4
  %s6 = sld [smem:[#allocation0]]
  $region46: #{tpu_custom_call.1} parent=0
    _
  %s8 = ssub.s32 1, %s6
  %s9 = scalar_select 0, %s8, %s6
  $region1: #{tpu_custom_call.1} parent=0
    #allocation2 [shape = 'u8[4096]{0}', space=vmem, size = 0x1000, scoped, tag = 'input window, operand 0, single buffered']
    #allocation3 [shape = 's32[1]{0}', space=sflag, size = 0x4, scoped, tag = 'scoped memory for tpu_custom_call.1']
    #allocation4 [shape = 's32[1]{0}', space=sflag, size = 0x4, scoped, tag = 'scoped memory for tpu_custom_call.1']
    #allocation5 [shape = 'u8[4096]{0}', space=vmem, size = 0x1000, scoped, tag = 'input window, operand 1, single buffered']
    #allocation6 [shape = 's32[1]{0}', space=sflag, size = 0x4, scoped, tag = 'scoped memory for tpu_custom_call.1']
    #allocation7 [shape = 'u8[512]{0}', space=vmem, size = 0x400, scoped, tag = 'output window, operand 0, single buffered']
    #allocation8 [shape = 'u8[512]{0}', space=vmem, size = 0x400, scoped, tag = 'output window, operand 1, single buffered']
    #allocation9 [shape = 's32[1]{0}', space=sflag, size = 0x4, scoped, tag = 'scoped memory for tpu_custom_call.1']
    #allocation10 [shape = 'u8[512]{0}', space=vmem, size = 0x400, scoped, tag = 'output window, operand 2, single buffered']
    %10 = vsyncpa [#allocation3], 0
    %11 = vsyncpa [#allocation6], 0
    %12 = vsyncpa [#allocation4], 0
    %13 = vsyncpa [#allocation9], 0
    // Predicated region
    $region2: #{tpu_custom_call.1} parent=1 // pred_check
      _
    $region3: #{tpu_custom_call.1} parent=1 // pred_check_branch
      %15 = sbr.rel (0) target = $region5
    $region4: #{tpu_custom_call.1} parent=1 // pred_region
      %s16 = sadd.s32 0, 0
      %p17 = scmp.lt.s32.totalorder %s16, 0
      %s18 = scalar_select %p17, %s16, 0
      %20 = vsyncadd [#allocation3], 0
      %s21 = smul.addr %s18, 8
      %s22 = scalar_lea.hbm %s0, %s21
      %s24 = sshll.u32 %s22, 4
      %s25 = int_to_ptr.hbm [resolvable:$true] %s24
      %s26 = sshll.u32 [#allocation2], 4
      %s27 = int_to_ptr.vmem [resolvable:$true] %s26
      %29 = dma.hbm_to_vmem [thread:$0]  %s25, 128, %s27, [#allocation3]
    $region5: #{tpu_custom_call.1} parent=1 // pred_fallthru
      _
    // Predicated region
    $region6: #{tpu_custom_call.1} parent=1 // pred_check
      _
    $region7: #{tpu_custom_call.1} parent=1 // pred_check_branch
      %31 = sbr.rel (0) target = $region9
    $region8: #{tpu_custom_call.1} parent=1 // pred_region
      %s32 = sadd.s32 0, 0
      %p33 = scmp.lt.s32.totalorder %s32, 0
      %s34 = scalar_select %p33, %s32, 0
      %36 = vsyncadd [#allocation6], 0
      %s37 = smul.addr %s34, 8
      %s38 = scalar_lea.hbm %s1, %s37
      %s40 = sshll.u32 %s38, 4
      %s41 = int_to_ptr.hbm [resolvable:$true] %s40
      %s42 = sshll.u32 [#allocation5], 4
      %s43 = int_to_ptr.vmem [resolvable:$true] %s42
      %45 = dma.hbm_to_vmem [thread:$0]  %s41, 128, %s43, [#allocation6]
    $region9: #{tpu_custom_call.1} parent=1 // pred_fallthru
      _
    // Predicated region
    $region10: #{tpu_custom_call.1} parent=1 // pred_check
      _
    $region11: #{tpu_custom_call.1} parent=1 // pred_check_branch
      %47 = sbr.rel (0) target = $region13
    $region12: #{tpu_custom_call.1} parent=1 // pred_region
      %49 = dma.done [#allocation3], 128
    $region13: #{tpu_custom_call.1} parent=1 // pred_fallthru
      _
    // Predicated region
    $region14: #{tpu_custom_call.1} parent=1 // pred_check
      _
    $region15: #{tpu_custom_call.1} parent=1 // pred_check_branch
      %51 = sbr.rel (0) target = $region17
    $region16: #{tpu_custom_call.1} parent=1 // pred_region
      %53 = dma.done [#allocation6], 128
    $region17: #{tpu_custom_call.1} parent=1 // pred_fallthru
      _
    %s54 = sadd.s32 0, 0
    %p55 = scmp.lt.s32.totalorder %s54, 0
    %s56 = scalar_select %p55, %s54, 0
    %s57 = sadd.s32 0, 0
    %p58 = scmp.lt.s32.totalorder %s57, 0
    %s59 = scalar_select %p58, %s57, 0
    %p60 = scmp.eq.s32.totalorder 0, 0
    // Predicated region
    $region18: #{tpu_custom_call.1} parent=1 // pred_check
      %p61 = pneg %p60
    $region19: #{tpu_custom_call.1} parent=1 // pred_check_branch
      %63 = sbr.rel (%p61) target = $region21
    $region20: #{tpu_custom_call.1} parent=1 // pred_region
      %vm64 = vcmask 40960
      %65 = vst.msk [vmem:[#allocation7] sm:$0x1] %vm64, 0.0
      %66 = vst.msk [vmem:[#allocation8] sm:$0x1] %vm64, 0.0
      %67 = vst.msk [vmem:[#allocation10] sm:$0x1] %vm64, 0.0
    $region21: #{tpu_custom_call.1} parent=1 // pred_fallthru
      _
    %v68 = vld [vmem:[#allocation2] sm:$0xff]
    %v69 = vld [vmem:[#allocation5] sm:$0xff]
    %vm70 = vcmask 48128
    %v71 = vsel %vm70, %v68, -inf
    %72 = vmax.xlane.f32.xlu0 %v71
    %v73 = vpop.xlane.xlu0 %72
    %vm74 = vcmp.eq.f32.partialorder %v68, %v73
    %v75 = vsel %vm74, 1, 0
    %v76 = vcvt.s32.f32 %v75
    %v77 = vsel %vm70, %v69, -inf
    %78 = vmax.xlane.f32.xlu0 %v77
    %v79 = vpop.xlane.xlu0 %78
    %vm80 = vcmp.eq.f32.partialorder %v69, %v79
    %v81 = vsel %vm80, 1, 0
    %v82 = vcvt.s32.f32 %v81
    %v83 = vld [vmem:[#allocation7] sm:$0x1]
    %v84 = vmul.f32 %v82, %v76
    %v85 = vsel %vm70, %v84, 0.0
    %v86 = vrot.slane %v85, 4
    %v87 = vadd.f32 %v85, %v86
    %v88 = vrot.slane %v87, 2
    %v89 = vadd.f32 %v87, %v88
    %v90 = vrot.slane %v89, 1
    %v91 = vadd.f32 %v89, %v90
    %v92 = vadd.f32 %v83, %v91
    %vm93 = vcmask 40960
    %94 = vst.msk [vmem:[#allocation7] sm:$0x1] %vm93, %v92
    %v95 = vld [vmem:[#allocation8] sm:$0x1]
    %v96 = vsel %vm70, %v76, 0.0
    %v97 = vrot.slane %v96, 4
    %v98 = vadd.f32 %v96, %v97
    %v99 = vrot.slane %v98, 2
    %v100 = vadd.f32 %v98, %v99
    %v101 = vrot.slane %v100, 1
    %v102 = vadd.f32 %v100, %v101
    %v103 = vadd.f32 %v95, %v102
    %104 = vst.msk [vmem:[#allocation8] sm:$0x1] %vm93, %v103
    %v105 = vld [vmem:[#allocation10] sm:$0x1]
    %v106 = vsel %vm70, %v82, 0.0
    %v107 = vrot.slane %v106, 4
    %v108 = vadd.f32 %v106, %v107
    %v109 = vrot.slane %v108, 2
    %v110 = vadd.f32 %v108, %v109
    %v111 = vrot.slane %v110, 1
    %v112 = vadd.f32 %v110, %v111
    %v113 = vadd.f32 %v105, %v112
    %114 = vst.msk [vmem:[#allocation10] sm:$0x1] %vm93, %v113
    // Predicated region
    $region22: #{tpu_custom_call.1} parent=1 // pred_check
      _
    $region23: #{tpu_custom_call.1} parent=1 // pred_check_branch
      %116 = sbr.rel (0) target = $region25
    $region24: #{tpu_custom_call.1} parent=1 // pred_region
      %118 = vsyncadd [#allocation4], 0
      %s120 = sshll.u32 [#allocation7], 4
      %s121 = int_to_ptr.vmem [resolvable:$true] %s120
      %s122 = sshll.u32 %s2, 4
      %s123 = int_to_ptr.hbm [resolvable:$true] %s122
      %125 = dma.vmem_to_hbm [thread:$0]  %s121, 16, %s123, [#allocation4]
    $region25: #{tpu_custom_call.1} parent=1 // pred_fallthru
      _
    // Predicated region
    $region26: #{tpu_custom_call.1} parent=1 // pred_check
      _
    $region27: #{tpu_custom_call.1} parent=1 // pred_check_branch
      %127 = sbr.rel (0) target = $region29
    $region28: #{tpu_custom_call.1} parent=1 // pred_region
      %129 = vsyncadd [#allocation9], 0
      %s131 = sshll.u32 [#allocation8], 4
      %s132 = int_to_ptr.vmem [resolvable:$true] %s131
      %s133 = sshll.u32 %s3, 4
      %s134 = int_to_ptr.hbm [resolvable:$true] %s133
      %136 = dma.vmem_to_hbm [thread:$0]  %s132, 16, %s134, [#allocation9]
    $region29: #{tpu_custom_call.1} parent=1 // pred_fallthru
      _
    // Predicated region
    $region30: #{tpu_custom_call.1} parent=1 // pred_check
      _
    $region31: #{tpu_custom_call.1} parent=1 // pred_check_branch
      %138 = sbr.rel (0) target = $region33
    $region32: #{tpu_custom_call.1} parent=1 // pred_region
      %140 = vsyncadd [#allocation9], 0
      %s142 = sshll.u32 [#allocation10], 4
      %s143 = int_to_ptr.vmem [resolvable:$true] %s142
      %s144 = sshll.u32 %s4, 4
      %s145 = int_to_ptr.hbm [resolvable:$true] %s144
      %147 = dma.vmem_to_hbm [thread:$0]  %s143, 16, %s145, [#allocation9]
    $region33: #{tpu_custom_call.1} parent=1 // pred_fallthru
      _
    // Predicated region
    $region34: #{tpu_custom_call.1} parent=1 // pred_check
      _
    $region35: #{tpu_custom_call.1} parent=1 // pred_check_branch
      %149 = sbr.rel (0) target = $region37
    $region36: #{tpu_custom_call.1} parent=1 // pred_region
      %151 = dma.done [#allocation4], 16
    $region37: #{tpu_custom_call.1} parent=1 // pred_fallthru
      _
    // Predicated region
    $region38: #{tpu_custom_call.1} parent=1 // pred_check
      _
    $region39: #{tpu_custom_call.1} parent=1 // pred_check_branch
      %153 = sbr.rel (0) target = $region41
    $region40: #{tpu_custom_call.1} parent=1 // pred_region
      %155 = dma.done [#allocation9], 16
    $region41: #{tpu_custom_call.1} parent=1 // pred_fallthru
      _
    // Predicated region
    $region42: #{tpu_custom_call.1} parent=1 // pred_check
      _
    $region43: #{tpu_custom_call.1} parent=1 // pred_check_branch
      %157 = sbr.rel (0) target = $region45
    $region44: #{tpu_custom_call.1} parent=1 // pred_region
      %159 = dma.done [#allocation9], 16
    $region45: #{tpu_custom_call.1} parent=1 // pred_fallthru
      _
    %160 = vsyncpa [#allocation3], 1
    %161 = vsyncpa [#allocation6], 1
    %162 = vsyncpa [#allocation4], 1
    %163 = vsyncpa [#allocation9], 1

</llo_original>
